<compile_context>
chip_gen: v7x
topology: tpu7x:2x2x1
jax: 0.10.0
libtpu: 0.0.40
codegen_flags: <defaults>
</compile_context>

<pallas_src>
import functools

import jax
import jax.numpy as jnp
from jax.experimental import pallas as pl
from jax.experimental.pallas import tpu as pltpu

_LANES = 128  # pad the task axis to a full vreg lane width -> unmasked vst


def _mask_mul_kernel(mask_ref, losses_ref, out_ref):
    # mask_ref / losses_ref / out_ref: VMEM (1, _LANES) f32 — one vreg each.
    out_ref[...] = mask_ref[...] * losses_ref[...]


_masked_call = pl.pallas_call(
    _mask_mul_kernel,
    out_shape=jax.ShapeDtypeStruct((1, _LANES), jnp.float32),
    in_specs=[
        pl.BlockSpec(memory_space=pltpu.MemorySpace.VMEM),  # persistent mask
        pl.BlockSpec(memory_space=pltpu.MemorySpace.VMEM),  # padded losses
    ],
    out_specs=pl.BlockSpec(memory_space=pltpu.MemorySpace.VMEM),
    # Reuse the padded-losses buffer (a per-call jit intermediate) as output.
    # The mask buffer (input 0) persists across calls and is deliberately
    # NOT aliased.
    input_output_aliases={1: 0},
)


def _one_hot_mask(step: int) -> jax.Array:
    """Persistent padded (1, _LANES) f32 one-hot mask at `step` (device)."""
    return jnp.zeros((1, _LANES), jnp.float32).at[0, step].set(1.0)


@functools.lru_cache(maxsize=None)
def _get_scaled_fn(num_tasks: int):
    """Single jitted fn (per num_tasks): pad -> mask-multiply kernel -> slice."""

    @jax.jit
    def run(mask_padded, losses_vec):
        padded = jnp.zeros((1, _LANES), jnp.float32).at[0, :num_tasks].set(
            losses_vec.astype(jnp.float32)
        )
        out = _masked_call(mask_padded, padded)
        return out[0, :num_tasks]

    return run


class WeightTracker:
    """JAX/Pallas port of the PyTorch WeightTracker.

    The curriculum bookkeeping (num_calls / step / scale) stays on the host,
    exactly mirroring the PyTorch module's Python-side state.  The one-hot
    mask lives as a persistent device buffer (like the PyTorch `self.masks`
    registered tensor) and is only rebuilt at step transitions; the per-call
    device work is a single fused pad + (1,128) vreg multiply + slice.
    Once the curriculum finishes (or distribution != 'one-hot') the mask is
    identity forever, so the kernel is skipped entirely.
    """

    def __init__(self, tasks, distribution="one-hot"):
        self.num_tasks = len(tasks)
        self.scale = distribution == "one-hot"
        self.num_calls = 0
        self.step = 0
        # Mirrors PyTorch: masks starts as one-hot at step 0 when scaling.
        self._mask = _one_hot_mask(0) if self.scale else None

    def forward(self, *x):
        raise NotImplementedError

    def get_scaled_losses(self, losses):
        # losses: list/tuple of scalar f32 values OR an already-stacked
        # (num_tasks,) array.
        if isinstance(losses, (list, tuple)):
            losses_vec = jnp.stack([jnp.asarray(l, jnp.float32) for l in losses])
        else:
            losses_vec = jnp.asarray(losses, jnp.float32)

        if self.scale:
            self.num_calls += 1
            step = int(self.num_calls / 40000.0)
            if self.step != step:
                self.step = step
                if step >= self.num_tasks:
                    # permanently switch to the all-ones (identity) mask,
                    # effective from this very call (matches PyTorch: masks
                    # are updated before the multiply).
                    self.scale = False
                    self._mask = None
                else:
                    # rebuilt only once per 40000 calls — not on the hot path
                    self._mask = _one_hot_mask(step)

        if not self.scale:
            # identity mask forever -> skip the kernel (pure overhead here)
            return losses_vec

        # one-hot regime: single precompiled kernel, persistent device mask
        return _get_scaled_fn(self.num_tasks)(self._mask, losses_vec)


if __name__ == "__main__":
    key = jax.random.PRNGKey(0)

    # cfg.tasks: 8 auxiliary tasks, cfg.distribution = 'one-hot'
    tasks = [f"aux_{i}" for i in range(8)]
    n = len(tasks)

    # deterministic per-task scalar losses
    loss_vec = jax.random.normal(key, (n,), dtype=jnp.float32)
    losses = [loss_vec[i] for i in range(n)]

    # --- call 1: num_calls=1, step=0 -> one-hot mask selects task 0 ---------
    tracker = WeightTracker(tasks, distribution="one-hot")
    out0 = jax.block_until_ready(tracker.get_scaled_losses(losses))
    exp0 = jnp.zeros((n,), jnp.float32).at[0].set(loss_vec[0])
    assert jnp.allclose(out0, exp0, atol=1e-6), (out0, exp0)

    # --- mid-curriculum: next call crosses into step=3 -> one-hot at task 3 --
    tracker.num_calls = 3 * 40000 - 1
    out3 = jax.block_until_ready(tracker.get_scaled_losses(losses))
    exp3 = jnp.zeros((n,), jnp.float32).at[3].set(loss_vec[3])
    assert tracker.step == 3 and tracker.scale
    assert jnp.allclose(out3, exp3, atol=1e-6), (out3, exp3)

    # --- end of curriculum: step reaches num_tasks -> identity mask, no kernel
    tracker.num_calls = n * 40000 - 1
    out_end = jax.block_until_ready(tracker.get_scaled_losses(losses))
    assert not tracker.scale
    assert jnp.allclose(out_end, loss_vec, atol=1e-6), (out_end, loss_vec)

    # subsequent calls stay identity and never touch the device kernel
    out_after = jax.block_until_ready(tracker.get_scaled_losses(losses))
    assert jnp.allclose(out_after, loss_vec, atol=1e-6)

    # non-one-hot distribution: identity from the start, no kernel ever
    tracker_uniform = WeightTracker(tasks, distribution="uniform")
    out_u = jax.block_until_ready(tracker_uniform.get_scaled_losses(losses))
    assert jnp.allclose(out_u, loss_vec, atol=1e-6)
    assert tracker_uniform.num_calls == 0

    print("KERNEL_OK")
</pallas_src>

<mosaic_0001>
module attributes {stable_mosaic.version = 11 : i64} {
  func.func @_mask_mul_kernel(%arg0: memref<1x128xf32, #tpu.memory_space<vmem>>, %arg1: memref<1x128xf32, #tpu.memory_space<vmem>>, %arg2: memref<1x128xf32, #tpu.memory_space<vmem>>) attributes {dimension_semantics = [], scalar_prefetch = 0 : i64, scratch_operands = 0 : i64, tpu.core_type = #tpu.core_type<tc>} {
    %c0 = arith.constant 0 : index
    %c0_0 = arith.constant 0 : index
    %0 = vector.load %arg0[%c0, %c0_0] : memref<1x128xf32, #tpu.memory_space<vmem>>, vector<1x128xf32>
    %c0_1 = arith.constant 0 : index
    %c0_2 = arith.constant 0 : index
    %1 = vector.load %arg1[%c0_1, %c0_2] : memref<1x128xf32, #tpu.memory_space<vmem>>, vector<1x128xf32>
    %2 = arith.mulf %0, %1 : vector<1x128xf32>
    %c0_3 = arith.constant 0 : index
    %c0_4 = arith.constant 0 : index
    %3 = vector.load %arg2[%c0_3, %c0_4] : memref<1x128xf32, #tpu.memory_space<vmem>>, vector<1x128xf32>
    tpu.vector_store %arg2[%c0_3, %c0_4], %2 {strides = array<i32>} : memref<1x128xf32, #tpu.memory_space<vmem>>, vector<1x128xf32>,
    return
  }
}

</mosaic_0001>

<llo_original>
// kernel: run.1
$region0: #{run.1}
  #allocation0 [shape = 'u32[]', space=smem, size = 0x4, offset = 0x4, fixed_abs, tag = 'smem constant byte address 0x4 - core index']
  #allocation1 [shape = 'u32[144,128]{1,0:T(1,128)}', space=vmem, size = 0x12000, scoped, tag = 'internal scratch']
  %s0 = inlined_call_operand.vmem [shape: f32[1,128], index: 0, kind: input, shape index: {}]
  %s1 = inlined_call_operand.vmem [shape: f32[1,128], index: 1, kind: input, shape index: {}, may-alias: {1,2}]
  %s2 = inlined_call_operand.vmem [shape: f32[1,128], index: 2, kind: output, shape index: {}, may-alias: {1,2}]
  %s3 = sld [smem:[#allocation0]]
  $region18: #{run.1} parent=0
    _
  %s5 = ssub.s32 1, %s3
  %s6 = scalar_select 0, %s5, %s3
  // Predicated region
  $region2: #{run.1} parent=0 // pred_check
    _
  $region3: #{run.1} parent=0 // pred_check_branch
    %8 = sbr.rel (0) target = $region5
  $region4: #{run.1} parent=0 // pred_region
    _
  $region5: #{run.1} parent=0 // pred_fallthru
    _
  // Predicated region
  $region6: #{run.1} parent=0 // pred_check
    _
  $region7: #{run.1} parent=0 // pred_check_branch
    %10 = sbr.rel (0) target = $region9
  $region8: #{run.1} parent=0 // pred_region
    _
  $region9: #{run.1} parent=0 // pred_fallthru
    _
  %v11 = vld [vmem:[%s0] sm:$0x1]
  %v12 = vld [vmem:[%s1] sm:$0x1]
  %v13 = vmul.f32 %v11, %v12
  %14 = vst [vmem:[%s2] sm:$0x1] %v13
  // Predicated region
  $region10: #{run.1} parent=0 // pred_check
    _
  $region11: #{run.1} parent=0 // pred_check_branch
    %16 = sbr.rel (0) target = $region13
  $region12: #{run.1} parent=0 // pred_region
    _
  $region13: #{run.1} parent=0 // pred_fallthru
    _
  // Predicated region
  $region14: #{run.1} parent=0 // pred_check
    _
  $region15: #{run.1} parent=0 // pred_check_branch
    %18 = sbr.rel (0) target = $region17
  $region16: #{run.1} parent=0 // pred_region
    _
  $region17: #{run.1} parent=0 // pred_fallthru
    _

</llo_original>
